<compile_context>
chip_gen: v5e
topology: v5e:2x2
jax: 0.10.0
libtpu: 0.0.40
codegen_flags: <defaults>
</compile_context>

<pallas_src>
import functools

import jax
import jax.numpy as jnp
from jax.experimental import pallas as pl
from jax.experimental.pallas import tpu as pltpu


def _res_block_kernel(x_ref, w2_ref, wr_ref, o_ref, *, compute_dtype):
    """out = relu(x @ (W2 + Wr)); single MXU matmul, f32 accumulation."""
    # Weight fusion: one elementwise add on a tiny (in_dim, out_dim_p) tile
    # (VPU), done in the weights' own dtype before any narrowing cast.
    w = (w2_ref[...] + wr_ref[...]).astype(compute_dtype)
    x = x_ref[...].astype(compute_dtype)
    acc = jnp.dot(x, w, preferred_element_type=jnp.float32)
    # relu epilogue in f32 (accumulator dtype), cast only on store.
    o_ref[...] = jnp.maximum(acc, 0.0).astype(o_ref.dtype)


def res_basic_linear_block(x, w1, w2, wr, *, compute_dtype=jnp.float32,
                           block_n=512):
    """Forward of ResBasicLinearBlock (relu / norm='none' / dropout_p=0).

    x  : (N, in_dim)
    w1 : (in_dim, in_dim)   linear1 weight^T  -- dead branch in the reference
                            forward (`out = self.linear2(x)` overwrites it),
                            accepted only for parameter fidelity, never DMA'd.
    w2 : (in_dim, out_dim)  linear2 weight^T
    wr : (in_dim, out_dim)  residual_linear weight^T

    compute_dtype: operand dtype fed to the MXU (jnp.bfloat16 recommended on
    v5e/v6e/v7x when looser numerics are acceptable); accumulation is f32.
    """
    del w1  # dead code in the reference module's forward

    N, in_dim = x.shape
    out_dim = w2.shape[1]

    # Lane-dense output: pad out_dim to a multiple of 128 with zero columns so
    # the kernel's stores are unmasked full-lane vst; slice it back off outside.
    out_dim_p = ((out_dim + 127) // 128) * 128
    if out_dim_p != out_dim:
        pad = out_dim_p - out_dim
        w2 = jnp.pad(w2, ((0, 0), (0, pad)))
        wr = jnp.pad(wr, ((0, 0), (0, pad)))

    # Small N: one grid step, full-array VMEM blocks (don't add grid overhead).
    # Large N: tile rows; the row axis is independent -> "parallel" so it can
    # shard across TensorCores (relevant on v7x's 2 TCs / 64 MiB VMEM).
    bn = N if N <= block_n else block_n
    grid = (pl.cdiv(N, bn),)

    kernel = functools.partial(_res_block_kernel, compute_dtype=compute_dtype)

    out = pl.pallas_call(
        kernel,
        out_shape=jax.ShapeDtypeStruct((N, out_dim_p), x.dtype),
        grid_spec=pl.GridSpec(
            grid=grid,
            in_specs=[
                pl.BlockSpec((bn, in_dim), lambda i: (i, 0)),
                pl.BlockSpec((in_dim, out_dim_p), lambda i: (0, 0)),
                pl.BlockSpec((in_dim, out_dim_p), lambda i: (0, 0)),
            ],
            out_specs=pl.BlockSpec((bn, out_dim_p), lambda i: (i, 0)),
        ),
        compiler_params=pltpu.CompilerParams(
            dimension_semantics=("parallel",)),
    )(x, w2, wr)

    return out[:, :out_dim] if out_dim_p != out_dim else out


if __name__ == "__main__":
    key = jax.random.PRNGKey(0)
    # Module config: in_dim=32, dim=None(->32), out_dim=64, activ='relu',
    # norm_layer='none', dropout_p=0 (all Linear layers bias=False). Batch N=8.
    N, in_dim, out_dim = 8, 32, 64
    kx, k1, k2, kr = jax.random.split(key, 4)

    x = jax.random.normal(kx, (N, in_dim), dtype=jnp.float32)

    # Deterministic synthetic init mimicking nn.Linear's U(-1/sqrt(fan_in), .),
    # weights stored transposed as (in_features, out_features).
    bound = 1.0 / float(jnp.sqrt(in_dim))
    w1 = jax.random.uniform(k1, (in_dim, in_dim), minval=-bound, maxval=bound,
                            dtype=jnp.float32)  # linear1 (dead branch)
    w2 = jax.random.uniform(k2, (in_dim, out_dim), minval=-bound, maxval=bound,
                            dtype=jnp.float32)  # linear2
    wr = jax.random.uniform(kr, (in_dim, out_dim), minval=-bound, maxval=bound,
                            dtype=jnp.float32)  # residual_linear

    # Pure-JAX reference (mirrors the PyTorch forward in f32).
    ref = jnp.maximum(x @ w2 + x @ wr, 0.0)

    # f32 path: matches the module's default numerics.
    out = jax.block_until_ready(res_basic_linear_block(x, w1, w2, wr))
    assert out.shape == (N, out_dim)
    assert jnp.allclose(out, ref, atol=1e-5, rtol=1e-5), "f32 mismatch vs reference"

    # bf16-operand path (v5e/v6e/v7x MXU fast path), f32 accumulation.
    out_bf16 = jax.block_until_ready(
        res_basic_linear_block(x, w1, w2, wr, compute_dtype=jnp.bfloat16))
    assert out_bf16.shape == (N, out_dim)
    assert jnp.allclose(out_bf16, ref, atol=5e-2, rtol=5e-2), "bf16 mismatch vs reference"

    print("KERNEL_OK")
</pallas_src>

<mosaic_0001>
module attributes {stable_mosaic.version = 11 : i64} {
  func.func @_res_block_kernel(%arg0: i32, %arg1: memref<8x32xf32, #tpu.memory_space<vmem>>, %arg2: memref<32x128xf32, #tpu.memory_space<vmem>>, %arg3: memref<32x128xf32, #tpu.memory_space<vmem>>, %arg4: memref<8x128xf32, #tpu.memory_space<vmem>>) attributes {dimension_semantics = [#tpu.dimension_semantics<parallel>], iteration_bounds = array<i64: 1>, scalar_prefetch = 0 : i64, scratch_operands = 0 : i64, tpu.core_type = #tpu.core_type<tc>, window_params = [{transform_indices = @transform_0, window_bounds = array<i64: 8, 32>}, {pipeline_mode = #tpu.pipeline_mode<synchronous>, transform_indices = @transform_1, window_bounds = array<i64: 32, 128>}, {pipeline_mode = #tpu.pipeline_mode<synchronous>, transform_indices = @transform_2, window_bounds = array<i64: 32, 128>}, {transform_indices = @transform_3, window_bounds = array<i64: 8, 128>}]} {
    %c0 = arith.constant 0 : index
    %c0_0 = arith.constant 0 : index
    %0 = vector.load %arg2[%c0, %c0_0] : memref<32x128xf32, #tpu.memory_space<vmem>>, vector<32x128xf32>
    %c0_1 = arith.constant 0 : index
    %c0_2 = arith.constant 0 : index
    %1 = vector.load %arg3[%c0_1, %c0_2] : memref<32x128xf32, #tpu.memory_space<vmem>>, vector<32x128xf32>
    %2 = arith.addf %0, %1 : vector<32x128xf32>
    %c0_3 = arith.constant 0 : index
    %c0_4 = arith.constant 0 : index
    %3 = vector.load %arg1[%c0_3, %c0_4] : memref<8x32xf32, #tpu.memory_space<vmem>>, vector<8x32xf32>
    %cst = arith.constant dense<0.000000e+00> : vector<8x128xf32>
    %4 = tpu.matmul %3, %2, %cst {dimension_numbers = #tpu.dot_dimension_numbers<[1], [0], [0], [1], [0, 0, 1, 1], [], []>} : vector<8x32xf32>, vector<32x128xf32>, vector<8x128xf32> -> vector<8x128xf32>
    %cst_5 = arith.constant 0.000000e+00 : f32
    %5 = vector.broadcast %cst_5 : f32 to vector<8x128xf32>
    %6 = arith.maximumf %4, %5 : vector<8x128xf32>
    %c0_6 = arith.constant 0 : index
    %c0_7 = arith.constant 0 : index
    %7 = vector.load %arg4[%c0_6, %c0_7] : memref<8x128xf32, #tpu.memory_space<vmem>>, vector<8x128xf32>
    tpu.vector_store %arg4[%c0_6, %c0_7], %6 {strides = array<i32>} : memref<8x128xf32, #tpu.memory_space<vmem>>, vector<8x128xf32>,
    return
  }
  func.func @transform_0(%arg0: i32) -> (i32, i32) {
    %c0_i32 = arith.constant 0 : i32
    %c0_i32_0 = arith.constant 0 : i32
    return %arg0, %c0_i32 : i32, i32
  }
  func.func @transform_1(%arg0: i32) -> (i32, i32) {
    %c0_i32 = arith.constant 0 : i32
    %c0_i32_0 = arith.constant 0 : i32
    %c0_i32_1 = arith.constant 0 : i32
    return %c0_i32, %c0_i32_0 : i32, i32
  }
  func.func @transform_2(%arg0: i32) -> (i32, i32) {
    %c0_i32 = arith.constant 0 : i32
    %c0_i32_0 = arith.constant 0 : i32
    %c0_i32_1 = arith.constant 0 : i32
    return %c0_i32, %c0_i32_0 : i32, i32
  }
  func.func @transform_3(%arg0: i32) -> (i32, i32) {
    %c0_i32 = arith.constant 0 : i32
    %c0_i32_0 = arith.constant 0 : i32
    return %arg0, %c0_i32 : i32, i32
  }
}

</mosaic_0001>

<llo_original>
// kernel: tpu_custom_call.1
$region0: #{tpu_custom_call.1}
  #allocation0 [shape = 'u32[]', space=smem, size = 0x4, offset = 0x4, fixed_abs, tag = 'smem constant byte address 0x4 - core index']
  #allocation1 [shape = 'u32[72,128]{1,0:T(1,128)}', space=vmem, size = 0x9000, scoped, tag = 'internal scratch']
  %s0 = inlined_call_operand.hbm [shape: f32[8,32], index: 0, kind: input, shape index: {}]
  %s1 = inlined_call_operand.hbm [shape: f32[32,128], index: 1, kind: input, shape index: {}]
  %s2 = inlined_call_operand.hbm [shape: f32[32,128], index: 2, kind: input, shape index: {}]
  %s3 = inlined_call_operand.hbm [shape: f32[8,128], index: 3, kind: output, shape index: {}]
  %s4 = sld [smem:[#allocation0]]
  $region34: #{tpu_custom_call.1} parent=0
    _
  %s6 = ssub.s32 1, %s4
  %s7 = scalar_select 0, %s6, %s4
  $region1: #{tpu_custom_call.1} parent=0
    #allocation2 [shape = 'u8[4096]{0}', space=vmem, size = 0x1000, scoped, tag = 'input window, operand 0, single buffered']
    #allocation3 [shape = 's32[1]{0}', space=sflag, size = 0x4, scoped, tag = 'scoped memory for tpu_custom_call.1']
    #allocation4 [shape = 's32[1]{0}', space=sflag, size = 0x4, scoped, tag = 'scoped memory for tpu_custom_call.1']
    #allocation5 [shape = 'u8[16384]{0}', space=vmem, size = 0x4000, scoped, tag = 'input window, operand 1, single buffered']
    #allocation6 [shape = 's32[1]{0}', space=sflag, size = 0x4, scoped, tag = 'scoped memory for tpu_custom_call.1']
    #allocation7 [shape = 'u8[16384]{0}', space=vmem, size = 0x4000, scoped, tag = 'input window, operand 2, single buffered']
    #allocation8 [shape = 'u8[4096]{0}', space=vmem, size = 0x1000, scoped, tag = 'output window, operand 0, single buffered']
    %8 = vsyncpa [#allocation3], 0
    %9 = vsyncpa [#allocation6], 0
    %10 = vsyncpa [#allocation4], 0
    // Predicated region
    $region2: #{tpu_custom_call.1} parent=1 // pred_check
      _
    $region3: #{tpu_custom_call.1} parent=1 // pred_check_branch
      %12 = sbr.rel (0) target = $region5
    $region4: #{tpu_custom_call.1} parent=1 // pred_region
      %14 = vsyncadd [#allocation3], 0
      %s16 = sshll.u32 %s0, 4
      %s17 = int_to_ptr.hbm [resolvable:$true] %s16
      %s18 = sshll.u32 [#allocation2], 4
      %s19 = int_to_ptr.vmem [resolvable:$true] %s18
      %21 = dma.hbm_to_vmem [thread:$0]  %s17, 128, %s19, [#allocation3]
    $region5: #{tpu_custom_call.1} parent=1 // pred_fallthru
      _
    // Predicated region
    $region6: #{tpu_custom_call.1} parent=1 // pred_check
      _
    $region7: #{tpu_custom_call.1} parent=1 // pred_check_branch
      %23 = sbr.rel (0) target = $region9
    $region8: #{tpu_custom_call.1} parent=1 // pred_region
      %25 = vsyncadd [#allocation6], 0
      %s26 = sshll.u32 %s1, 4
      %s27 = int_to_ptr.hbm [resolvable:$true] %s26
      %s28 = sshll.u32 [#allocation5], 4
      %s29 = int_to_ptr.vmem [resolvable:$true] %s28
      %34 = dma.hbm_to_vmem [thread:$0]  %s27, 512, %s29, [#allocation6], 128, 128, 8
    $region9: #{tpu_custom_call.1} parent=1 // pred_fallthru
      _
    // Predicated region
    $region10: #{tpu_custom_call.1} parent=1 // pred_check
      _
    $region11: #{tpu_custom_call.1} parent=1 // pred_check_branch
      %36 = sbr.rel (0) target = $region13
    $region12: #{tpu_custom_call.1} parent=1 // pred_region
      %38 = vsyncadd [#allocation6], 0
      %s39 = sshll.u32 %s2, 4
      %s40 = int_to_ptr.hbm [resolvable:$true] %s39
      %s41 = sshll.u32 [#allocation7], 4
      %s42 = int_to_ptr.vmem [resolvable:$true] %s41
      %47 = dma.hbm_to_vmem [thread:$0]  %s40, 512, %s42, [#allocation6], 128, 128, 8
    $region13: #{tpu_custom_call.1} parent=1 // pred_fallthru
      _
    // Predicated region
    $region14: #{tpu_custom_call.1} parent=1 // pred_check
      _
    $region15: #{tpu_custom_call.1} parent=1 // pred_check_branch
      %49 = sbr.rel (0) target = $region17
    $region16: #{tpu_custom_call.1} parent=1 // pred_region
      %51 = dma.done [#allocation3], 128
    $region17: #{tpu_custom_call.1} parent=1 // pred_fallthru
      _
    // Predicated region
    $region18: #{tpu_custom_call.1} parent=1 // pred_check
      _
    $region19: #{tpu_custom_call.1} parent=1 // pred_check_branch
      %53 = sbr.rel (0) target = $region21
    $region20: #{tpu_custom_call.1} parent=1 // pred_region
      %55 = dma.done [#allocation6], 512
    $region21: #{tpu_custom_call.1} parent=1 // pred_fallthru
      _
    // Predicated region
    $region22: #{tpu_custom_call.1} parent=1 // pred_check
      _
    $region23: #{tpu_custom_call.1} parent=1 // pred_check_branch
      %57 = sbr.rel (0) target = $region25
    $region24: #{tpu_custom_call.1} parent=1 // pred_region
      %59 = dma.done [#allocation6], 512
    $region25: #{tpu_custom_call.1} parent=1 // pred_fallthru
      _
    %v60 = vld [vmem:[#allocation5] sm:$0xff]
    %v61 = vld [vmem:[#allocation5 + $0x8] sm:$0xff]
    %v62 = vld [vmem:[#allocation5 + $0x10] sm:$0xff]
    %v63 = vld [vmem:[#allocation5 + $0x18] sm:$0xff]
    %v64 = vld [vmem:[#allocation7] sm:$0xff]
    %v65 = vld [vmem:[#allocation7 + $0x8] sm:$0xff]
    %v66 = vld [vmem:[#allocation7 + $0x10] sm:$0xff]
    %v67 = vld [vmem:[#allocation7 + $0x18] sm:$0xff]
    %v68 = vadd.f32 %v60, %v64
    %v69 = vadd.f32 %v61, %v65
    %v70 = vadd.f32 %v62, %v66
    %v71 = vadd.f32 %v63, %v67
    %v72 = vld [vmem:[#allocation2] sm:$0xff]
    %vm73 = vcmask 261120
    %v75 = vsel %vm73, %v72, 0
    %77 = vmatpush.msra.mxu0 0.0
    %78 = vmatpush.msra.mxu0 0.0
    %79 = vmatpush.msra.mxu0 0.0
    %80 = vmatpush.msra.mxu0 0.0
    %81 = vmatpush.msra.mxu0 0.0
    %82 = vmatpush.msra.mxu0 0.0
    %83 = vmatpush.msra.mxu0 0.0
    %84 = vmatpush.msra.mxu0 0.0
    %85 = vmatpush.msra.mxu0 0.0
    %86 = vmatpush.msra.mxu0 0.0
    %87 = vmatpush.msra.mxu0 0.0
    %88 = vmatpush.msra.mxu0 0.0
    %89 = vmatpush.msra.mxu0 %v71
    %90 = vmatpush.msra.mxu0 %v70
    %91 = vmatpush.msra.mxu0 %v69
    %92 = vmatpush.msra.mxu0 %v68
    %93 = vmatmul.f32.gmra.mxu0 %v75
    %v94 = vpop.f32.mrf.mxu0
    %v95 = vadd.f32 0.0, %v94
    %96 = vdwg.mxu0
    %v97 = vmax.f32 %v95, 0.0
    %98 = vst [vmem:[#allocation8] sm:$0xff] %v97
    // Predicated region
    $region26: #{tpu_custom_call.1} parent=1 // pred_check
      _
    $region27: #{tpu_custom_call.1} parent=1 // pred_check_branch
      %100 = sbr.rel (0) target = $region29
    $region28: #{tpu_custom_call.1} parent=1 // pred_region
      %102 = vsyncadd [#allocation4], 0
      %s104 = sshll.u32 [#allocation8], 4
      %s105 = int_to_ptr.vmem [resolvable:$true] %s104
      %s106 = sshll.u32 %s3, 4
      %s107 = int_to_ptr.hbm [resolvable:$true] %s106
      %109 = dma.vmem_to_hbm [thread:$0]  %s105, 128, %s107, [#allocation4]
    $region29: #{tpu_custom_call.1} parent=1 // pred_fallthru
      _
    // Predicated region
    $region30: #{tpu_custom_call.1} parent=1 // pred_check
      _
    $region31: #{tpu_custom_call.1} parent=1 // pred_check_branch
      %111 = sbr.rel (0) target = $region33
    $region32: #{tpu_custom_call.1} parent=1 // pred_region
      %113 = dma.done [#allocation4], 128
    $region33: #{tpu_custom_call.1} parent=1 // pred_fallthru
      _
    %114 = vsyncpa [#allocation3], 1
    %115 = vsyncpa [#allocation6], 1
    %116 = vsyncpa [#allocation4], 1

</llo_original>
